<compile_context>
chip_gen: v5e
topology: v5e:2x2
jax: 0.10.0
libtpu: 0.0.40
codegen_flags: <defaults>
</compile_context>

<pallas_src>
import math

import jax
import jax.numpy as jnp
from jax.experimental import pallas as pl
from jax.experimental.pallas import tpu as pltpu

_SQRT2 = math.sqrt(2.0)
_LANE = 128


def _gelu_f32(z):
    # Exact-erf GELU (matches torch.nn.GELU default), kept in f32.
    return 0.5 * z * (1.0 + jax.lax.erf(z / _SQRT2))


# ---------------------------------------------------------------------------
# Fused kernels
# ---------------------------------------------------------------------------
def _make_fused_kernel(num_fan_layers, hidden_dim, use_slabs):
    """Ref order: x, [W_i, b_i] * num_fan, W_out, b_out, o, (act_scratch if use_slabs).

    Gates are pre-folded into the weights, embedding is pre-folded into W_0.
    W_i is [wp|wp|wg] (mask path) or [wp|wg] (slab path); biases stay f32.
    """
    q = hidden_dim // 4

    if not use_slabs:
        # Full-width merged matmul + lane-mask select (H/4 not lane-aligned, e.g. H=128).
        def kernel(x_ref, *refs):
            o_ref = refs[-1]
            w_refs = refs[:-1]
            batch = x_ref.shape[0]

            lane = jax.lax.broadcasted_iota(jnp.int32, (batch, hidden_dim), 1)
            is_cos = lane < q
            is_sin = lane < 2 * q

            act = x_ref[...]
            for i in range(num_fan_layers):
                w = w_refs[2 * i][...]
                b = w_refs[2 * i + 1][...]
                z = jnp.dot(act.astype(w.dtype), w,
                            preferred_element_type=jnp.float32) + b
                act = jnp.where(is_cos, jnp.cos(z),
                                jnp.where(is_sin, jnp.sin(z), _gelu_f32(z)))

            w_out = w_refs[2 * num_fan_layers][...]
            b_out = w_refs[2 * num_fan_layers + 1][...]
            o_ref[...] = (jnp.dot(act.astype(w_out.dtype), w_out,
                                  preferred_element_type=jnp.float32)
                          + b_out).astype(o_ref.dtype)

        return kernel

    # Lane-aligned slab path: narrower [wp|wg] matmul, transcendentals only where needed,
    # results written into lane-aligned slabs of a VMEM activation scratch.
    def kernel(x_ref, *refs):
        act_scr = refs[-1]
        o_ref = refs[-2]
        w_refs = refs[:-2]

        act = x_ref[...]
        for i in range(num_fan_layers):
            w = w_refs[2 * i][...]                       # (K, 3H/4) bf16
            b = w_refs[2 * i + 1][...]                   # (1, 3H/4) f32
            z = jnp.dot(act.astype(w.dtype), w,
                        preferred_element_type=jnp.float32) + b
            p = z[:, :q]
            act_scr[:, :q] = jnp.cos(p)
            act_scr[:, q:2 * q] = jnp.sin(p)
            act_scr[:, 2 * q:] = _gelu_f32(z[:, q:])
            act = act_scr[...]

        w_out = w_refs[2 * num_fan_layers][...]
        b_out = w_refs[2 * num_fan_layers + 1][...]
        o_ref[...] = (jnp.dot(act.astype(w_out.dtype), w_out,
                              preferred_element_type=jnp.float32)
                      + b_out).astype(o_ref.dtype)

    return kernel


# ---------------------------------------------------------------------------
# Host-side weight preparation (done ONCE per parameter set)
# ---------------------------------------------------------------------------
def prepare_fused_params(params, matmul_dtype=jnp.bfloat16):
    fan = params["fan_layers"]
    hidden = fan[0]["wp"].shape[0]
    q = hidden // 4
    use_slabs = (q % _LANE == 0)

    ws, bs = [], []
    for lyr in fan:
        if use_slabs:
            w = jnp.concatenate([lyr["wp"], lyr["wg"]], axis=1)              # (H, 3H/4)
            b = jnp.concatenate([lyr["bp"], lyr["bg"]], axis=0)
        else:
            w = jnp.concatenate([lyr["wp"], lyr["wp"], lyr["wg"]], axis=1)   # (H, H)
            b = jnp.concatenate([lyr["bp"], lyr["bp"], lyr["bg"]], axis=0)
        ws.append(w)
        bs.append(b)

    # Fold embedding Linear into the first merged FAN matmul (no nonlinearity between).
    w0 = ws[0]
    ws[0] = params["emb_w"] @ w0                       # (input_dim, merged_width)
    bs[0] = params["emb_b"] @ w0 + bs[0]

    # Fold sigmoid(gate_i) / (1 - gate_i) into the ROWS of the next matmul's weight.
    out_w = params["out_w"]
    out_b = params["out_b"]
    next_ws = ws[1:] + [out_w]
    scaled_next = []
    for i, lyr in enumerate(fan):
        gate = jax.nn.sigmoid(lyr["gate"][0])
        scale = jnp.concatenate([
            jnp.full((2 * q,), gate, jnp.float32),
            jnp.full((hidden - 2 * q,), 1.0 - gate, jnp.float32),
        ])
        scaled_next.append(next_ws[i] * scale[:, None])
    ws = [ws[0]] + scaled_next[:-1]
    out_w = scaled_next[-1]

    # Pad the final projection to a lane-dense multiple of 128.
    odim = out_w.shape[1]
    opad = pl.cdiv(odim, _LANE) * _LANE
    w_out = jnp.zeros((hidden, opad), jnp.float32).at[:, :odim].set(out_w)
    b_out = jnp.zeros((opad,), jnp.float32).at[:odim].set(out_b)

    flat = []
    for w, b in zip(ws, bs):
        flat.append(w.astype(matmul_dtype))
        flat.append(b.astype(jnp.float32).reshape(1, -1))
    flat.append(w_out.astype(matmul_dtype))
    flat.append(b_out.reshape(1, -1))
    return flat, odim, opad, use_slabs, hidden


# ---------------------------------------------------------------------------
# Forward builder: prep once, return a jitted forward
# ---------------------------------------------------------------------------
def build_fan_gated_forward(params, matmul_dtype=jnp.bfloat16):
    flat, odim, opad, use_slabs, hidden = prepare_fused_params(params, matmul_dtype)
    num_fan = len(params["fan_layers"])
    kernel = _make_fused_kernel(num_fan, hidden, use_slabs)

    @jax.jit
    def forward(x):
        batch, in_dim = x.shape
        # Batch grid only when it is worth it (>=2 tiles of 128 rows); v7x gets both TCs.
        if batch >= 2 * _LANE and batch % _LANE == 0:
            bm = _LANE
        else:
            bm = batch
        grid = (batch // bm,)

        in_specs = [pl.BlockSpec((bm, in_dim), lambda b: (b, 0))]
        for arr in flat:
            in_specs.append(pl.BlockSpec(arr.shape, lambda b: (0, 0)))
        out_spec = pl.BlockSpec((bm, opad), lambda b: (b, 0))

        scratch = [pltpu.VMEM((bm, hidden), jnp.float32)] if use_slabs else []

        out = pl.pallas_call(
            kernel,
            out_shape=jax.ShapeDtypeStruct((batch, opad), jnp.float32),
            grid_spec=pltpu.PrefetchScalarGridSpec(
                num_scalar_prefetch=0,
                grid=grid,
                in_specs=in_specs,
                out_specs=out_spec,
                scratch_shapes=scratch,
            ),
            compiler_params=pltpu.CompilerParams(
                dimension_semantics=("parallel",)),
        )(x, *flat)
        return out[:, :odim]

    return forward


# ---------------------------------------------------------------------------
# Deterministic parameter init (PyTorch-style uniform(-1/sqrt(fan_in), 1/sqrt(fan_in)))
# ---------------------------------------------------------------------------
def init_params(key, input_dim, hidden_dim, output_dim, num_layers):
    def lin_init(k, fan_in, fan_out):
        k1, k2 = jax.random.split(k)
        bound = 1.0 / math.sqrt(fan_in)
        w = jax.random.uniform(k1, (fan_in, fan_out), jnp.float32, -bound, bound)
        b = jax.random.uniform(k2, (fan_out,), jnp.float32, -bound, bound)
        return w, b

    keys = jax.random.split(key, num_layers + 1)
    params = {}
    params["emb_w"], params["emb_b"] = lin_init(keys[0], input_dim, hidden_dim)

    fan_layers = []
    for i in range(num_layers - 1):
        kp, kg, kgate = jax.random.split(keys[1 + i], 3)
        wp, bp = lin_init(kp, hidden_dim, hidden_dim // 4)
        wg, bg = lin_init(kg, hidden_dim, hidden_dim - hidden_dim // 2)
        gate = jax.random.normal(kgate, (1,), jnp.float32)
        fan_layers.append({"wp": wp, "bp": bp, "wg": wg, "bg": bg, "gate": gate})
    params["fan_layers"] = fan_layers

    params["out_w"], params["out_b"] = lin_init(keys[num_layers], hidden_dim, output_dim)
    return params


# ---------------------------------------------------------------------------
# Pure-JAX f32 reference (unfused, same math) for correctness check
# ---------------------------------------------------------------------------
def reference_forward(x, params):
    out = x @ params["emb_w"] + params["emb_b"]
    for lyr in params["fan_layers"]:
        p = out @ lyr["wp"] + lyr["bp"]
        g = _gelu_f32(out @ lyr["wg"] + lyr["bg"])
        gate = 1.0 / (1.0 + jnp.exp(-lyr["gate"][0]))
        out = jnp.concatenate(
            [gate * jnp.cos(p), gate * jnp.sin(p), (1.0 - gate) * g], axis=-1
        )
    return out @ params["out_w"] + params["out_b"]


if __name__ == "__main__":
    key = jax.random.PRNGKey(0)
    k_x1, k_p1, k_x2, k_p2 = jax.random.split(key, 4)

    # Tolerances are loose because matmul operands are bf16 (f32 accumulation).
    RTOL, ATOL = 5e-2, 5e-2

    # --- Test 1: small-H masked-select path (H=128 -> q=32 not lane-aligned) ---
    x1 = jax.random.normal(k_x1, (8, 4), jnp.float32)
    params1 = init_params(k_p1, 4, 128, 4, 3)
    fwd1 = build_fan_gated_forward(params1)
    y1 = jax.block_until_ready(fwd1(x1))
    y1_ref = reference_forward(x1, params1)
    assert y1.shape == (8, 4)
    assert jnp.allclose(y1, y1_ref, rtol=RTOL, atol=ATOL), "mismatch (mask path)"

    # --- Test 2: lane-aligned slab path (H=512 -> q=128), narrower [wp|wg] matmuls ---
    x2 = jax.random.normal(k_x2, (8, 4), jnp.float32)
    params2 = init_params(k_p2, 4, 512, 3, 3)
    fwd2 = build_fan_gated_forward(params2)
    y2 = jax.block_until_ready(fwd2(x2))
    y2_ref = reference_forward(x2, params2)
    assert y2.shape == (8, 3)
    assert jnp.allclose(y2, y2_ref, rtol=RTOL, atol=ATOL), "mismatch (slab path)"

    print("KERNEL_OK")
</pallas_src>

<mosaic_0001>
module attributes {stable_mosaic.version = 11 : i64} {
  func.func @kernel(%arg0: i32, %arg1: memref<8x4xf32, #tpu.memory_space<vmem>>, %arg2: memref<4x128xbf16, #tpu.memory_space<vmem>>, %arg3: memref<1x128xf32, #tpu.memory_space<vmem>>, %arg4: memref<128x128xbf16, #tpu.memory_space<vmem>>, %arg5: memref<1x128xf32, #tpu.memory_space<vmem>>, %arg6: memref<128x128xbf16, #tpu.memory_space<vmem>>, %arg7: memref<1x128xf32, #tpu.memory_space<vmem>>, %arg8: memref<8x128xf32, #tpu.memory_space<vmem>>) attributes {dimension_semantics = [#tpu.dimension_semantics<parallel>], iteration_bounds = array<i64: 1>, scalar_prefetch = 0 : i64, scratch_operands = 0 : i64, tpu.core_type = #tpu.core_type<tc>, window_params = [{transform_indices = @transform_0, window_bounds = array<i64: 8, 4>}, {pipeline_mode = #tpu.pipeline_mode<synchronous>, transform_indices = @transform_1, window_bounds = array<i64: 4, 128>}, {pipeline_mode = #tpu.pipeline_mode<synchronous>, transform_indices = @transform_2, window_bounds = array<i64: 1, 128>}, {pipeline_mode = #tpu.pipeline_mode<synchronous>, transform_indices = @transform_3, window_bounds = array<i64: 128, 128>}, {pipeline_mode = #tpu.pipeline_mode<synchronous>, transform_indices = @transform_4, window_bounds = array<i64: 1, 128>}, {pipeline_mode = #tpu.pipeline_mode<synchronous>, transform_indices = @transform_5, window_bounds = array<i64: 128, 128>}, {pipeline_mode = #tpu.pipeline_mode<synchronous>, transform_indices = @transform_6, window_bounds = array<i64: 1, 128>}, {transform_indices = @transform_7, window_bounds = array<i64: 8, 128>}]} {
    %0 = tpu.iota {dimensions = array<i32: 1>} : vector<8x128xi32>
    %c32_i32 = arith.constant 32 : i32
    %1 = vector.broadcast %c32_i32 : i32 to vector<8x128xi32>
    %2 = arith.cmpi slt, %0, %1 : vector<8x128xi32>
    %c64_i32 = arith.constant 64 : i32
    %3 = vector.broadcast %c64_i32 : i32 to vector<8x128xi32>
    %4 = arith.cmpi slt, %0, %3 : vector<8x128xi32>
    %c0 = arith.constant 0 : index
    %c0_0 = arith.constant 0 : index
    %5 = vector.load %arg1[%c0, %c0_0] : memref<8x4xf32, #tpu.memory_space<vmem>>, vector<8x4xf32>
    %c0_1 = arith.constant 0 : index
    %c0_2 = arith.constant 0 : index
    %6 = vector.load %arg2[%c0_1, %c0_2] : memref<4x128xbf16, #tpu.memory_space<vmem>>, vector<4x128xbf16>
    %c0_3 = arith.constant 0 : index
    %c0_4 = arith.constant 0 : index
    %7 = vector.load %arg3[%c0_3, %c0_4] : memref<1x128xf32, #tpu.memory_space<vmem>>, vector<1x128xf32>
    %8 = arith.truncf %5 : vector<8x4xf32> to vector<8x4xbf16>
    %cst = arith.constant dense<0.000000e+00> : vector<8x128xf32>
    %9 = tpu.matmul %8, %6, %cst {dimension_numbers = #tpu.dot_dimension_numbers<[1], [0], [0], [1], [0, 0, 1, 1], [], []>} : vector<8x4xbf16>, vector<4x128xbf16>, vector<8x128xf32> -> vector<8x128xf32>
    %10 = vector.broadcast %7 : vector<1x128xf32> to vector<8x128xf32>
    %11 = arith.addf %9, %10 : vector<8x128xf32>
    %12 = math.cos %11 : vector<8x128xf32>
    %13 = math.sin %11 : vector<8x128xf32>
    %cst_5 = arith.constant 5.000000e-01 : f32
    %14 = vector.broadcast %cst_5 : f32 to vector<8x128xf32>
    %15 = arith.mulf %14, %11 : vector<8x128xf32>
    %cst_6 = arith.constant 1.41421354 : f32
    %16 = vector.broadcast %cst_6 : f32 to vector<8x128xf32>
    %17 = arith.divf %11, %16 : vector<8x128xf32>
    %18 = math.erf %17 : vector<8x128xf32>
    %cst_7 = arith.constant 1.000000e+00 : f32
    %19 = vector.broadcast %cst_7 : f32 to vector<8x128xf32>
    %20 = arith.addf %19, %18 : vector<8x128xf32>
    %21 = arith.mulf %15, %20 : vector<8x128xf32>
    %22 = arith.select %4, %13, %21 : vector<8x128xi1>, vector<8x128xf32>
    %23 = arith.select %2, %12, %22 : vector<8x128xi1>, vector<8x128xf32>
    %c0_8 = arith.constant 0 : index
    %c0_9 = arith.constant 0 : index
    %24 = vector.load %arg4[%c0_8, %c0_9] : memref<128x128xbf16, #tpu.memory_space<vmem>>, vector<128x128xbf16>
    %c0_10 = arith.constant 0 : index
    %c0_11 = arith.constant 0 : index
    %25 = vector.load %arg5[%c0_10, %c0_11] : memref<1x128xf32, #tpu.memory_space<vmem>>, vector<1x128xf32>
    %26 = arith.truncf %23 : vector<8x128xf32> to vector<8x128xbf16>
    %cst_12 = arith.constant dense<0.000000e+00> : vector<8x128xf32>
    %27 = tpu.matmul %26, %24, %cst_12 {dimension_numbers = #tpu.dot_dimension_numbers<[1], [0], [0], [1], [0, 0, 1, 1], [], []>} : vector<8x128xbf16>, vector<128x128xbf16>, vector<8x128xf32> -> vector<8x128xf32>
    %28 = vector.broadcast %25 : vector<1x128xf32> to vector<8x128xf32>
    %29 = arith.addf %27, %28 : vector<8x128xf32>
    %30 = math.cos %29 : vector<8x128xf32>
    %31 = math.sin %29 : vector<8x128xf32>
    %cst_13 = arith.constant 5.000000e-01 : f32
    %32 = vector.broadcast %cst_13 : f32 to vector<8x128xf32>
    %33 = arith.mulf %32, %29 : vector<8x128xf32>
    %cst_14 = arith.constant 1.41421354 : f32
    %34 = vector.broadcast %cst_14 : f32 to vector<8x128xf32>
    %35 = arith.divf %29, %34 : vector<8x128xf32>
    %36 = math.erf %35 : vector<8x128xf32>
    %cst_15 = arith.constant 1.000000e+00 : f32
    %37 = vector.broadcast %cst_15 : f32 to vector<8x128xf32>
    %38 = arith.addf %37, %36 : vector<8x128xf32>
    %39 = arith.mulf %33, %38 : vector<8x128xf32>
    %40 = arith.select %4, %31, %39 : vector<8x128xi1>, vector<8x128xf32>
    %41 = arith.select %2, %30, %40 : vector<8x128xi1>, vector<8x128xf32>
    %c0_16 = arith.constant 0 : index
    %c0_17 = arith.constant 0 : index
    %42 = vector.load %arg6[%c0_16, %c0_17] : memref<128x128xbf16, #tpu.memory_space<vmem>>, vector<128x128xbf16>
    %c0_18 = arith.constant 0 : index
    %c0_19 = arith.constant 0 : index
    %43 = vector.load %arg7[%c0_18, %c0_19] : memref<1x128xf32, #tpu.memory_space<vmem>>, vector<1x128xf32>
    %44 = arith.truncf %41 : vector<8x128xf32> to vector<8x128xbf16>
    %cst_20 = arith.constant dense<0.000000e+00> : vector<8x128xf32>
    %45 = tpu.matmul %44, %42, %cst_20 {dimension_numbers = #tpu.dot_dimension_numbers<[1], [0], [0], [1], [0, 0, 1, 1], [], []>} : vector<8x128xbf16>, vector<128x128xbf16>, vector<8x128xf32> -> vector<8x128xf32>
    %46 = vector.broadcast %43 : vector<1x128xf32> to vector<8x128xf32>
    %47 = arith.addf %45, %46 : vector<8x128xf32>
    %c0_21 = arith.constant 0 : index
    %c0_22 = arith.constant 0 : index
    %48 = vector.load %arg8[%c0_21, %c0_22] : memref<8x128xf32, #tpu.memory_space<vmem>>, vector<8x128xf32>
    tpu.vector_store %arg8[%c0_21, %c0_22], %47 {strides = array<i32>} : memref<8x128xf32, #tpu.memory_space<vmem>>, vector<8x128xf32>,
    return
  }
  func.func @transform_0(%arg0: i32) -> (i32, i32) {
    %c0_i32 = arith.constant 0 : i32
    %c0_i32_0 = arith.constant 0 : i32
    return %arg0, %c0_i32 : i32, i32
  }
  func.func @transform_1(%arg0: i32) -> (i32, i32) {
    %c0_i32 = arith.constant 0 : i32
    %c0_i32_0 = arith.constant 0 : i32
    %c0_i32_1 = arith.constant 0 : i32
    return %c0_i32, %c0_i32_0 : i32, i32
  }
  func.func @transform_2(%arg0: i32) -> (i32, i32) {
    %c0_i32 = arith.constant 0 : i32
    %c0_i32_0 = arith.constant 0 : i32
    %c0_i32_1 = arith.constant 0 : i32
    return %c0_i32, %c0_i32_0 : i32, i32
  }
  func.func @transform_3(%arg0: i32) -> (i32, i32) {
    %c0_i32 = arith.constant 0 : i32
    %c0_i32_0 = arith.constant 0 : i32
    %c0_i32_1 = arith.constant 0 : i32
    return %c0_i32, %c0_i32_0 : i32, i32
  }
  func.func @transform_4(%arg0: i32) -> (i32, i32) {
    %c0_i32 = arith.constant 0 : i32
    %c0_i32_0 = arith.constant 0 : i32
    %c0_i32_1 = arith.constant 0 : i32
    return %c0_i32, %c0_i32_0 : i32, i32
  }
  func.func @transform_5(%arg0: i32) -> (i32, i32) {
    %c0_i32 = arith.constant 0 : i32
    %c0_i32_0 = arith.constant 0 : i32
    %c0_i32_1 = arith.constant 0 : i32
    return %c0_i32, %c0_i32_0 : i32, i32
  }
  func.func @transform_6(%arg0: i32) -> (i32, i32) {
    %c0_i32 = arith.constant 0 : i32
    %c0_i32_0 = arith.constant 0 : i32
    %c0_i32_1 = arith.constant 0 : i32
    return %c0_i32, %c0_i32_0 : i32, i32
  }
  func.func @transform_7(%arg0: i32) -> (i32, i32) {
    %c0_i32 = arith.constant 0 : i32
    %c0_i32_0 = arith.constant 0 : i32
    return %arg0, %c0_i32 : i32, i32
  }
}

</mosaic_0001>

<llo_original>
// kernel: forward.1
$region0: #{forward.1}
  #allocation0 [shape = 'u32[]', space=smem, size = 0x4, offset = 0x4, fixed_abs, tag = 'smem constant byte address 0x4 - core index']
  #allocation1 [shape = 'u32[72,128]{1,0:T(1,128)}', space=vmem, size = 0x9000, scoped, tag = 'internal scratch']
  %s0 = inlined_call_operand.vmem [shape: f32[8,4], index: 0, kind: input, shape index: {}]
  %s1 = inlined_call_operand.vmem [shape: bf16[4,128], index: 1, kind: input, shape index: {}]
  %s2 = inlined_call_operand.vmem [shape: f32[1,128], index: 2, kind: input, shape index: {}]
  %s3 = inlined_call_operand.hbm [shape: bf16[128,128], index: 3, kind: input, shape index: {}]
  %s4 = inlined_call_operand.vmem [shape: f32[1,128], index: 4, kind: input, shape index: {}]
  %s5 = inlined_call_operand.hbm [shape: bf16[128,128], index: 5, kind: input, shape index: {}]
  %s6 = inlined_call_operand.vmem [shape: f32[1,128], index: 6, kind: input, shape index: {}]
  %s7 = inlined_call_operand.vmem [shape: f32[8,128], index: 7, kind: output, shape index: {}]
  %s8 = sld [smem:[#allocation0]]
  $region46: #{forward.1} parent=0
    _
  %s10 = ssub.s32 1, %s8
  %s11 = scalar_select 0, %s10, %s8
  $region1: #{forward.1} parent=0
    #allocation2 [shape = 'u8[32768]{0}', space=vmem, size = 0x8000, scoped, tag = 'input window, operand 3, single buffered']
    #allocation3 [shape = 's32[1]{0}', space=sflag, size = 0x4, scoped, tag = 'scoped memory for forward.1']
    #allocation4 [shape = 'u8[32768]{0}', space=vmem, size = 0x8000, scoped, tag = 'input window, operand 5, single buffered']
    #allocation5 [shape = 's32[1]{0}', space=sflag, size = 0x4, scoped, tag = 'scoped memory for forward.1']
    %12 = vsyncpa [#allocation3], 0
    %13 = vsyncpa [#allocation5], 0
    // Predicated region
    $region2: #{forward.1} parent=1 // pred_check
      _
    $region3: #{forward.1} parent=1 // pred_check_branch
      %15 = sbr.rel (0) target = $region5
    $region4: #{forward.1} parent=1 // pred_region
      _
    $region5: #{forward.1} parent=1 // pred_fallthru
      _
    // Predicated region
    $region6: #{forward.1} parent=1 // pred_check
      _
    $region7: #{forward.1} parent=1 // pred_check_branch
      %17 = sbr.rel (0) target = $region9
    $region8: #{forward.1} parent=1 // pred_region
      _
    $region9: #{forward.1} parent=1 // pred_fallthru
      _
    // Predicated region
    $region10: #{forward.1} parent=1 // pred_check
      _
    $region11: #{forward.1} parent=1 // pred_check_branch
      %19 = sbr.rel (0) target = $region13
    $region12: #{forward.1} parent=1 // pred_region
      _
    $region13: #{forward.1} parent=1 // pred_fallthru
      _
    // Predicated region
    $region14: #{forward.1} parent=1 // pred_check
      _
    $region15: #{forward.1} parent=1 // pred_check_branch
      %21 = sbr.rel (0) target = $region17
    $region16: #{forward.1} parent=1 // pred_region
      %23 = vsyncadd [#allocation3], 0
      %s24 = sshll.u32 %s3, 4
      %s25 = int_to_ptr.hbm [resolvable:$true] %s24
      %s26 = sshll.u32 [#allocation2], 4
      %s27 = int_to_ptr.vmem [resolvable:$true] %s26
      %32 = dma.hbm_to_vmem [thread:$0]  %s25, 1024, %s27, [#allocation3], 64, 64, 4
    $region17: #{forward.1} parent=1 // pred_fallthru
      _
    // Predicated region
    $region18: #{forward.1} parent=1 // pred_check
      _
    $region19: #{forward.1} parent=1 // pred_check_branch
      %34 = sbr.rel (0) target = $region21
    $region20: #{forward.1} parent=1 // pred_region
      _
    $region21: #{forward.1} parent=1 // pred_fallthru
      _
    // Predicated region
    $region22: #{forward.1} parent=1 // pred_check
      _
    $region23: #{forward.1} parent=1 // pred_check_branch
      %36 = sbr.rel (0) target = $region25
    $region24: #{forward.1} parent=1 // pred_region
      %38 = vsyncadd [#allocation5], 0
      %s39 = sshll.u32 %s5, 4
      %s40 = int_to_ptr.hbm [resolvable:$true] %s39
      %s41 = sshll.u32 [#allocation4], 4
      %s42 = int_to_ptr.vmem [resolvable:$true] %s41
      %47 = dma.hbm_to_vmem [thread:$0]  %s40, 1024, %s42, [#allocation5], 64, 64, 4
    $region25: #{forward.1} parent=1 // pred_fallthru
      _
    // Predicated region
    $region26: #{forward.1} parent=1 // pred_check
      _
    $region27: #{forward.1} parent=1 // pred_check_branch
      %49 = sbr.rel (0) target = $region29
    $region28: #{forward.1} parent=1 // pred_region
      _
    $region29: #{forward.1} parent=1 // pred_fallthru
      _
    // Predicated region
    $region30: #{forward.1} parent=1 // pred_check
      _
    $region31: #{forward.1} parent=1 // pred_check_branch
      %51 = sbr.rel (0) target = $region33
    $region32: #{forward.1} parent=1 // pred_region
      %53 = dma.done [#allocation3], 1024
    $region33: #{forward.1} parent=1 // pred_fallthru
      _
    // Predicated region
    $region34: #{forward.1} parent=1 // pred_check
      _
    $region35: #{forward.1} parent=1 // pred_check_branch
      %55 = sbr.rel (0) target = $region37
    $region36: #{forward.1} parent=1 // pred_region
      %57 = dma.done [#allocation5], 1024
    $region37: #{forward.1} parent=1 // pred_fallthru
      _
    %v59 = vlaneseq
    %v60 = vand.u32 %v59, 127
    %vm61 = vcmp.lt.s32.totalorder %v60, 32
    %vm62 = vcmp.lt.s32.totalorder %v60, 64
    %v63 = vld [vmem:[%s0] sm:$0xff]
    %v64 = vld [vmem:[%s1] sm:$0x3]
    %v65 = vld [vmem:[%s2] sm:$0x1]
    %v66 = vpack.c.bf16 %v63, %v63
    %v68 = vperm.slane %v65, 0
    %vm70 = vcmask 31744
    %v72 = vsel %vm70, %v66, 0
    %vm74 = vcmask 1041408
    %v76 = vsel %vm74, %v64, 0
    %78 = vmatpush.bf16.msra.mxu0 0
    %79 = vmatpush.bf16.msra.mxu0 0
    %80 = vmatpush.bf16.msra.mxu0 0
    %81 = vmatpush.bf16.msra.mxu0 0
    %82 = vmatpush.bf16.msra.mxu0 0
    %83 = vmatpush.bf16.msra.mxu0 0
    %84 = vmatpush.bf16.msra.mxu0 0
    %85 = vmatpush.bf16.msra.mxu0 %v76
    %86 = vmatmul.bf16.gmra.mxu0 %v72
    %v87 = vpop.f32.mrf.mxu0
    %v88 = vadd.f32 %v68, %v87
    %v89 = vpop.f32.mrf.mxu0
    %90 = vdwg.mxu0
    %v91 = vand.u32 2147483647, %v88
    %vm92 = vcmp.le.f32.partialorder %v91, 0.7853982
    %vm93 = vcmp.lt.s32.totalorder %v88, 0
    %v94 = vand.u32 %v88, 2139095040
    %v95 = vshrl.u32 %v94, 23
    %v96 = vsub.s32 %v95, 127
    %v97 = vand.u32 2147483647, %v88
    %v98 = vand.u32 %v97, 8388607
    %v99 = vor.u32 %v98, 8388608
    %v100 = vsub.s32 0, %v99
    %v101 = vadd.s32 %v96, 1
    %vm102 = vcmp.gt.s32.totalorder %v101, 0
    %v103 = vsel %vm102, %v101, 0
    %v104 = vshrl.u32 %v103, 5
    %v105 = vand.u32 %v103, 31
    %v106 = vsub.s32 32, %v105
    %v107 = vshrl.u32 683565275, %v106
    %v108 = vshll.u32 683565275, %v105
    %v109 = vshrl.u32 2475754826, %v106
    %v110 = vor.u32 %v108, %v109
    %v111 = vshll.u32 2475754826, %v105
    %v112 = vshrl.u32 2131351028, %v106
    %v113 = vor.u32 %v111, %v112
    %v114 = vshll.u32 2131351028, %v105
    %v115 = vshrl.u32 2102212464, %v106
    %v116 = vor.u32 %v114, %v115
    %v117 = vshll.u32 2102212464, %v105
    %v118 = vshrl.u32 920167782, %v106
    %v119 = vor.u32 %v117, %v118
    %v120 = vshll.u32 920167782, %v105
    %v121 = vshrl.u32 1326507024, %v106
    %v122 = vor.u32 %v120, %v121
    %vm123 = vcmp.lt.s32.totalorder %v104, 1
    %vm124 = vcmp.lt.s32.totalorder %v104, 2
    %vm125 = vcmp.lt.s32.totalorder %v104, 3
    %vm126 = vcmp.lt.s32.totalorder %v104, 4
    %v127 = vsel %vm123, %v107, %v110
    %v128 = vsel %vm126, %v116, 2102212464
    %v129 = vsel %vm125, %v113, %v128
    %v130 = vsel %vm124, %v127, %v129
    %v131 = vsel %vm123, %v110, %v113
    %v132 = vsel %vm126, %v119, 920167782
    %v133 = vsel %vm125, %v116, %v132
    %v134 = vsel %vm124, %v131, %v133
    %v135 = vsel %vm123, %v113, %v116
    %v136 = vsel %vm126, %v122, 1326507024
    %v137 = vsel %vm125, %v119, %v136
    %v138 = vsel %vm124, %v135, %v137
    %v139 = vshll.u32 %v99, 8
    %v140 = vand.u32 %v139, 65535
    %v141 = vshrl.u32 %v139, 16
    %v142 = vand.u32 %v138, 65535
    %v143 = vshrl.u32 %v138, 16
    %v144 = vmul.u32 %v140, %v142
    %v145 = vmul.u32 %v140, %v143
    %v146 = vmul.u32 %v141, %v142
    %v147 = vmul.u32 %v141, %v143
    %v148 = vshll.u32 %v145, 16
    %v149 = vshrl.u32 %v145, 16
    %v150 = vshll.u32 %v146, 16
    %v151 = vshrl.u32 %v146, 16
    %vm152 = vc.u32 %v144, %v148
    %v153 = vsel %vm152, 1, 0
    %v154 = vadd.s32 %v144, %v148
    %v155 = vadd.s32 %v147, %v153
    %vm156 = vc.u32 %v154, %v150
    %v157 = vsel %vm156, 1, 0
    %v158 = vadd.s32 %v154, %v150
    %v159 = vadd.s32 %v155, %v157
    %v160 = vadd.s32 %v159, %v149
    %v161 = vadd.s32 %v160, %v151
    %v162 = vand.u32 %v139, 65535
    %v163 = vshrl.u32 %v139, 16
    %v164 = vand.u32 %v134, 65535
    %v165 = vshrl.u32 %v134, 16
    %v166 = vmul.u32 %v162, %v164
    %v167 = vmul.u32 %v162, %v165
    %v168 = vmul.u32 %v163, %v164
    %v169 = vmul.u32 %v163, %v165
    %v170 = vshll.u32 %v167, 16
    %v171 = vshrl.u32 %v167, 16
    %v172 = vshll.u32 %v168, 16
    %v173 = vshrl.u32 %v168, 16
    %vm174 = vc.u32 %v166, %v170
    %v175 = vsel %vm174, 1, 0
    %v176 = vadd.s32 %v166, %v170
    %v177 = vadd.s32 %v169, %v175
    %vm178 = vc.u32 %v176, %v172
    %v179 = vsel %vm178, 1, 0
    %v180 = vadd.s32 %v176, %v172
    %v181 = vadd.s32 %v177, %v179
    %v182 = vadd.s32 %v181, %v171
    %v183 = vadd.s32 %v182, %v173
    %v184 = vmul.u32 %v139, %v130
    %v185 = vadd.s32 %v161, %v180
    %vm186 = vc.u32 %v161, %v180
    %v187 = vadd.s32 %v183, 1
    %v188 = vsel %vm186, %v187, %v183
    %v189 = vadd.s32 %v184, %v188
    %v190 = vadd.s32 %v189, 536870912
    %v191 = vshrl.u32 %v190, 30
    %v192 = vshll.u32 %v191, 30
    %v193 = vsub.s32 %v189, %v192
    %vm194 = vcmp.lt.s32.totalorder %v193, 0
    %v195 = vsub.s32 0, %v193
    %v196 = vsel %vm194, %v195, %v193
    %v197 = vclz %v196
    %v198 = vsub.s32 %v197, 2
    %vm199 = vcmp.gt.s32.totalorder 0, %v198
    %v200 = vsel %vm199, 0, %v198
    %v201 = vsub.s32 32, %v200
    %v202 = vshll.u32 %v193, %v200
    %v203 = vshrl.u32 %v185, %v201
    %v204 = vor.u32 %v202, %v203
    %v205 = vsub.s32 4294967266, %v200
    %v206 = vadd.s32 %v205, 127
    %v207 = vshll.u32 %v206, 23
    %v208 = vor.u32 4788187, %v207
    %v209 = vand.u32 2147483647, %v208
    %v211 = vcvt.s32.f32 %v204
    %v212 = vmul.f32 %v211, %v209
    %v213 = vxor.u32 %v212, 2147483648
    %v214 = vsel %vm93, %v213, %v212
    %v215 = vsub.s32 4, %v191
    %v216 = vsel %vm93, %v215, %v191
    %v217 = vsel %vm92, %v88, %v214
    %v218 = vsel %vm92, 0, %v216
    %v219 = vmul.f32 %v217, %v217
    %v220 = vmul.f32 %v219, -0.001358992
    %v221 = vadd.f32 %v220, 0.041655596
    %v222 = vmul.f32 %v219, %v221
    %v223 = vadd.f32 %v222, -0.4999988
    %v224 = vmul.f32 %v219, %v223
    %v225 = vadd.f32 1.0, %v224
    %v226 = vmul.f32 %v217, %v217
    %v227 = vmul.f32 %v226, -0.00019511016
    %v228 = vadd.f32 %v227, 0.008332121
    %v229 = vmul.f32 %v226, %v228
    %v230 = vadd.f32 %v229, -0.16666654
    %v231 = vmul.f32 %v226, %v230
    %v232 = vadd.f32 %v231, 1.0
    %v233 = vmul.f32 %v232, %v217
    %vm234 = vweird.f32 %v88
    %v235 = vand.u32 %v218, 3
    %vm236 = vcmp.lt.s32.totalorder %v235, 2
    %vm237 = vcmp.eq.s32.totalorder %v235, 0
    %v238 = vxor.u32 %v233, 2147483648
    %v239 = vsel %vm237, %v225, %v238
    %vm240 = vcmp.eq.s32.totalorder %v235, 2
    %v241 = vxor.u32 %v225, 2147483648
    %v242 = vsel %vm240, %v241, %v233
    %v243 = vsel %vm236, %v239, %v242
    %v244 = vsel %vm234, nan, %v243
    %v245 = vand.u32 2147483647, %v88
    %vm246 = vcmp.le.f32.partialorder %v245, 0.7853982
    %vm247 = vcmp.lt.s32.totalorder %v88, 0
    %v248 = vand.u32 %v88, 2139095040
    %v249 = vshrl.u32 %v248, 23
    %v250 = vsub.s32 %v249, 127
    %v251 = vand.u32 2147483647, %v88
    %v252 = vand.u32 %v251, 8388607
    %v253 = vor.u32 %v252, 8388608
    %v254 = vsub.s32 0, %v253
    %v255 = vadd.s32 %v250, 1
    %vm256 = vcmp.gt.s32.totalorder %v255, 0
    %v257 = vsel %vm256, %v255, 0
    %v258 = vshrl.u32 %v257, 5
    %v259 = vand.u32 %v257, 31
    %v260 = vsub.s32 32, %v259
    %v261 = vshrl.u32 683565275, %v260
    %v262 = vshll.u32 683565275, %v259
    %v263 = vshrl.u32 2475754826, %v260
    %v264 = vor.u32 %v262, %v263
    %v265 = vshll.u32 2475754826, %v259
    %v266 = vshrl.u32 2131351028, %v260
    %v267 = vor.u32 %v265, %v266
    %v268 = vshll.u32 2131351028, %v259
    %v269 = vshrl.u32 2102212464, %v260
    %v270 = vor.u32 %v268, %v269
    %v271 = vshll.u32 2102212464, %v259
    %v272 = vshrl.u32 920167782, %v260
    %v273 = vor.u32 %v271, %v272
    %v274 = vshll.u32 920167782, %v259
    %v275 = vshrl.u32 1326507024, %v260
    %v276 = vor.u32 %v274, %v275
    %vm277 = vcmp.lt.s32.totalorder %v258, 1
    %vm278 = vcmp.lt.s32.totalorder %v258, 2
    %vm279 = vcmp.lt.s32.totalorder %v258, 3
    %vm280 = vcmp.lt.s32.totalorder %v258, 4
    %v281 = vsel %vm277, %v261, %v264
    %v282 = vsel %vm280, %v270, 2102212464
    %v283 = vsel %vm279, %v267, %v282
    %v284 = vsel %vm278, %v281, %v283
    %v285 = vsel %vm277, %v264, %v267
    %v286 = vsel %vm280, %v273, 920167782
    %v287 = vsel %vm279, %v270, %v286
    %v288 = vsel %vm278, %v285, %v287
    %v289 = vsel %vm277, %v267, %v270
    %v290 = vsel %vm280, %v276, 1326507024
    %v291 = vsel %vm279, %v273, %v290
    %v292 = vsel %vm278, %v289, %v291
    %v293 = vshll.u32 %v253, 8
    %v294 = vand.u32 %v293, 65535
    %v295 = vshrl.u32 %v293, 16
    %v296 = vand.u32 %v292, 65535
    %v297 = vshrl.u32 %v292, 16
    %v298 = vmul.u32 %v294, %v296
    %v299 = vmul.u32 %v294, %v297
    %v300 = vmul.u32 %v295, %v296
    %v301 = vmul.u32 %v295, %v297
    %v302 = vshll.u32 %v299, 16
    %v303 = vshrl.u32 %v299, 16
    %v304 = vshll.u32 %v300, 16
    %v305 = vshrl.u32 %v300, 16
    %vm306 = vc.u32 %v298, %v302
    %v307 = vsel %vm306, 1, 0
    %v308 = vadd.s32 %v298, %v302
    %v309 = vadd.s32 %v301, %v307
    %vm310 = vc.u32 %v308, %v304
    %v311 = vsel %vm310, 1, 0
    %v312 = vadd.s32 %v308, %v304
    %v313 = vadd.s32 %v309, %v311
    %v314 = vadd.s32 %v313, %v303
    %v315 = vadd.s32 %v314, %v305
    %v316 = vand.u32 %v293, 65535
    %v317 = vshrl.u32 %v293, 16
    %v318 = vand.u32 %v288, 65535
    %v319 = vshrl.u32 %v288, 16
    %v320 = vmul.u32 %v316, %v318
    %v321 = vmul.u32 %v316, %v319
    %v322 = vmul.u32 %v317, %v318
    %v323 = vmul.u32 %v317, %v319
    %v324 = vshll.u32 %v321, 16
    %v325 = vshrl.u32 %v321, 16
    %v326 = vshll.u32 %v322, 16
    %v327 = vshrl.u32 %v322, 16
    %vm328 = vc.u32 %v320, %v324
    %v329 = vsel %vm328, 1, 0
    %v330 = vadd.s32 %v320, %v324
    %v331 = vadd.s32 %v323, %v329
    %vm332 = vc.u32 %v330, %v326
    %v333 = vsel %vm332, 1, 0
    %v334 = vadd.s32 %v330, %v326
    %v335 = vadd.s32 %v331, %v333
    %v336 = vadd.s32 %v335, %v325
    %v337 = vadd.s32 %v336, %v327
    %v338 = vmul.u32 %v293, %v284
    %v339 = vadd.s32 %v315, %v334
    %vm340 = vc.u32 %v315, %v334
    %v341 = vadd.s32 %v337, 1
    %v342 = vsel %vm340, %v341, %v337
    %v343 = vadd.s32 %v338, %v342
    %v344 = vadd.s32 %v343, 536870912
    %v345 = vshrl.u32 %v344, 30
    %v346 = vshll.u32 %v345, 30
    %v347 = vsub.s32 %v343, %v346
    %vm348 = vcmp.lt.s32.totalorder %v347, 0
    %v349 = vsub.s32 0, %v347
    %v350 = vsel %vm348, %v349, %v347
    %v351 = vclz %v350
    %v352 = vsub.s32 %v351, 2
    %vm353 = vcmp.gt.s32.totalorder 0, %v352
    %v354 = vsel %vm353, 0, %v352
    %v355 = vsub.s32 32, %v354
    %v356 = vshll.u32 %v347, %v354
    %v357 = vshrl.u32 %v339, %v355
    %v358 = vor.u32 %v356, %v357
    %v359 = vsub.s32 4294967266, %v354
    %v360 = vadd.s32 %v359, 127
    %v361 = vshll.u32 %v360, 23
    %v362 = vor.u32 4788187, %v361
    %v363 = vand.u32 2147483647, %v362
    %v365 = vcvt.s32.f32 %v358
    %v366 = vmul.f32 %v365, %v363
    %v367 = vxor.u32 %v366, 2147483648
    %v368 = vsel %vm247, %v367, %v366
    %v369 = vsub.s32 4, %v345
    %v370 = vsel %vm247, %v369, %v345
    %v371 = vsel %vm246, %v88, %v368
    %v372 = vsel %vm246, 0, %v370
    %v373 = vmul.f32 %v371, %v371
    %v374 = vmul.f32 %v373, -0.001358992
    %v375 = vadd.f32 %v374, 0.041655596
    %v376 = vmul.f32 %v373, %v375
    %v377 = vadd.f32 %v376, -0.4999988
    %v378 = vmul.f32 %v373, %v377
    %v379 = vadd.f32 1.0, %v378
    %v380 = vmul.f32 %v371, %v371
    %v381 = vmul.f32 %v380, -0.00019511016
    %v382 = vadd.f32 %v381, 0.008332121
    %v383 = vmul.f32 %v380, %v382
    %v384 = vadd.f32 %v383, -0.16666654
    %v385 = vmul.f32 %v380, %v384
    %v386 = vadd.f32 %v385, 1.0
    %v387 = vmul.f32 %v386, %v371
    %vm388 = vweird.f32 %v88
    %v389 = vadd.s32 %v372, 3
    %v390 = vand.u32 %v389, 3
    %vm391 = vcmp.lt.s32.totalorder %v390, 2
    %vm392 = vcmp.eq.s32.totalorder %v390, 0
    %v393 = vxor.u32 %v387, 2147483648
    %v394 = vsel %vm392, %v379, %v393
    %vm395 = vcmp.eq.s32.totalorder %v390, 2
    %v396 = vxor.u32 %v379, 2147483648
    %v397 = vsel %vm395, %v396, %v387
    %v398 = vsel %vm391, %v394, %v397
    %v399 = vsel %vm388, nan, %v398
    %v400 = vmul.f32 %v88, 0.5
    %v401 = vrcp.pop 1.4142135
    %v402 = vmul.f32 1.4142135, %v401
    %v403 = vsub.f32 1.0, %v402
    %v404 = vmul.f32 %v401, %v403
    %v405 = vadd.f32 %v401, %v404
    %vm406 = vweird.f32 %v401
    %v407 = vsel %vm406, %v401, %v405
    %v408 = vmul.f32 %v88, %v407
    %v409 = vmul.f32 %v408, %v408
    %v410 = vmin.f32 16.0, %v409
    %v411 = vmul.f32 %v410, 2.1237322e-06
    %v412 = vadd.f32 %v411, 0.00028619796
    %v413 = vmul.f32 %v410, %v412
    %v414 = vadd.f32 %v413, 0.0036580483
    %v415 = vmul.f32 %v410, %v414
    %v416 = vadd.f32 %v415, 0.05243302
    %v417 = vmul.f32 %v410, %v416
    %v418 = vadd.f32 %v417, 0.18741608
    %v419 = vmul.f32 %v410, %v418
    %v420 = vadd.f32 %v419, 1.1283791
    %v421 = vmul.f32 %v408, %v420
    %v422 = vmul.f32 %v410, 3.8918573e-05
    %v423 = vadd.f32 %v422, 0.001143296
    %v424 = vmul.f32 %v410, %v423
    %v425 = vadd.f32 %v424, 0.014752088
    %v426 = vmul.f32 %v410, %v425
    %v427 = vadd.f32 %v426, 0.112945676
    %v428 = vmul.f32 %v410, %v427
    %v429 = vadd.f32 %v428, 0.4994258
    %v430 = vmul.f32 %v410, %v429
    %v431 = vadd.f32 %v430, 1.0
    %v432 = vrcp.pop %v431
    %v433 = vmul.f32 %v431, %v432
    %v434 = vsub.f32 1.0, %v433
    %v435 = vmul.f32 %v432, %v434
    %v436 = vadd.f32 %v432, %v435
    %vm437 = vweird.f32 %v431
    %vm438 = vweird.f32 %v432
    %vm439 = vmor %vm437, %vm438
    %v440 = vsel %vm439, %v432, %v436
    %v441 = vand.u32 2147483647, %v431
    %vm442 = vcmp.eq.f32.partialorder %v441, 8.507059e+37
    %v443 = vand.u32 %v431, 2147483648
    %v444 = vor.u32 1.1754944e-38, %v443
    %v445 = vsel %vm442, %v444, %v440
    %v446 = vmul.f32 %v421, %v445
    %v447 = vmin.f32 %v446, 1.0
    %v448 = vmax.f32 %v447, -1.0
    %v449 = vadd.f32 %v448, 1.0
    %v450 = vmul.f32 %v400, %v449
    %v451 = vsel %vm62, %v399, %v450
    %v452 = vsel %vm61, %v244, %v451
    %v453 = vld [vmem:[#allocation2] sm:$0xf]
    %v454 = vld [vmem:[#allocation2 + $0x4] sm:$0xf]
    %v455 = vld [vmem:[#allocation2 + $0x8] sm:$0xf]
    %v456 = vld [vmem:[#allocation2 + $0xc] sm:$0xf]
    %v457 = vld [vmem:[#allocation2 + $0x10] sm:$0xf]
    %v458 = vld [vmem:[#allocation2 + $0x14] sm:$0xf]
    %v459 = vld [vmem:[#allocation2 + $0x18] sm:$0xf]
    %v460 = vld [vmem:[#allocation2 + $0x1c] sm:$0xf]
    %v461 = vld [vmem:[#allocation2 + $0x20] sm:$0xf]
    %v462 = vld [vmem:[#allocation2 + $0x24] sm:$0xf]
    %v463 = vld [vmem:[#allocation2 + $0x28] sm:$0xf]
    %v464 = vld [vmem:[#allocation2 + $0x2c] sm:$0xf]
    %v465 = vld [vmem:[#allocation2 + $0x30] sm:$0xf]
    %v466 = vld [vmem:[#allocation2 + $0x34] sm:$0xf]
    %v467 = vld [vmem:[#allocation2 + $0x38] sm:$0xf]
    %v468 = vld [vmem:[#allocation2 + $0x3c] sm:$0xf]
    %v469 = vld [vmem:[%s4] sm:$0x1]
    %v470 = vpack.c.bf16 %v452, %v452
    %v472 = vperm.slane %v469, 0
    %v490 = vunpack.c.l.b16 %v453
    %v491 = vunpack.c.l.b16 %v454
    %v492 = vunpack.c.l.b16 %v455
    %v493 = vunpack.c.l.b16 %v456
    %v494 = vunpack.c.l.b16 %v457
    %v495 = vunpack.c.l.b16 %v458
    %v496 = vunpack.c.l.b16 %v459
    %v497 = vunpack.c.l.b16 %v460
    %v498 = vunpack.c.l.b16 %v461
    %v499 = vunpack.c.l.b16 %v462
    %v500 = vunpack.c.l.b16 %v463
    %v501 = vunpack.c.l.b16 %v464
    %v502 = vunpack.c.l.b16 %v465
    %v503 = vunpack.c.l.b16 %v466
    %v504 = vunpack.c.l.b16 %v467
    %v505 = vunpack.c.l.b16 %v468
    %v506 = vpack.c.b16 %v491, %v490
    %v507 = vpack.c.b16 %v493, %v492
    %v508 = vpack.c.b16 %v495, %v494
    %v509 = vpack.c.b16 %v497, %v496
    %v510 = vpack.c.b16 %v499, %v498
    %v511 = vpack.c.b16 %v501, %v500
    %v512 = vpack.c.b16 %v503, %v502
    %v513 = vpack.c.b16 %v505, %v504
    %522 = vmatpush.bf16.msra.mxu0 %v513
    %523 = vmatpush.bf16.msra.mxu0 %v512
    %524 = vmatpush.bf16.msra.mxu0 %v511
    %525 = vmatpush.bf16.msra.mxu0 %v510
    %526 = vmatpush.bf16.msra.mxu0 %v509
    %527 = vmatpush.bf16.msra.mxu0 %v508
    %528 = vmatpush.bf16.msra.mxu0 %v507
    %529 = vmatpush.bf16.msra.mxu0 %v506
    %530 = vmatmul.bf16.gmra.mxu0 %v470
    %v531 = vpop.f32.mrf.mxu0
    %v532 = vadd.f32 %v472, %v531
    %v533 = vpop.f32.mrf.mxu0
    %534 = vdwg.mxu0
    %v535 = vand.u32 2147483647, %v532
    %vm536 = vcmp.le.f32.partialorder %v535, 0.7853982
    %vm537 = vcmp.lt.s32.totalorder %v532, 0
    %v538 = vand.u32 %v532, 2139095040
    %v539 = vshrl.u32 %v538, 23
    %v540 = vsub.s32 %v539, 127
    %v541 = vand.u32 2147483647, %v532
    %v542 = vand.u32 %v541, 8388607
    %v543 = vor.u32 %v542, 8388608
    %v544 = vsub.s32 0, %v543
    %v545 = vadd.s32 %v540, 1
    %vm546 = vcmp.gt.s32.totalorder %v545, 0
    %v547 = vsel %vm546, %v545, 0
    %v548 = vshrl.u32 %v547, 5
    %v549 = vand.u32 %v547, 31
    %v550 = vsub.s32 32, %v549
    %v551 = vshrl.u32 683565275, %v550
    %v552 = vshll.u32 683565275, %v549
    %v553 = vshrl.u32 2475754826, %v550
    %v554 = vor.u32 %v552, %v553
    %v555 = vshll.u32 2475754826, %v549
    %v556 = vshrl.u32 2131351028, %v550
    %v557 = vor.u32 %v555, %v556
    %v558 = vshll.u32 2131351028, %v549
    %v559 = vshrl.u32 2102212464, %v550
    %v560 = vor.u32 %v558, %v559
    %v561 = vshll.u32 2102212464, %v549
    %v562 = vshrl.u32 920167782, %v550
    %v563 = vor.u32 %v561, %v562
    %v564 = vshll.u32 920167782, %v549
    %v565 = vshrl.u32 1326507024, %v550
    %v566 = vor.u32 %v564, %v565
    %vm567 = vcmp.lt.s32.totalorder %v548, 1
    %vm568 = vcmp.lt.s32.totalorder %v548, 2
    %vm569 = vcmp.lt.s32.totalorder %v548, 3
    %vm570 = vcmp.lt.s32.totalorder %v548, 4
    %v571 = vsel %vm567, %v551, %v554
    %v572 = vsel %vm570, %v560, 2102212464
    %v573 = vsel %vm569, %v557, %v572
    %v574 = vsel %vm568, %v571, %v573
    %v575 = vsel %vm567, %v554, %v557
    %v576 = vsel %vm570, %v563, 920167782
    %v577 = vsel %vm569, %v560, %v576
    %v578 = vsel %vm568, %v575, %v577
    %v579 = vsel %vm567, %v557, %v560
    %v580 = vsel %vm570, %v566, 1326507024
    %v581 = vsel %vm569, %v563, %v580
    %v582 = vsel %vm568, %v579, %v581
    %v583 = vshll.u32 %v543, 8
    %v584 = vand.u32 %v583, 65535
    %v585 = vshrl.u32 %v583, 16
    %v586 = vand.u32 %v582, 65535
    %v587 = vshrl.u32 %v582, 16
    %v588 = vmul.u32 %v584, %v586
    %v589 = vmul.u32 %v584, %v587
    %v590 = vmul.u32 %v585, %v586
    %v591 = vmul.u32 %v585, %v587
    %v592 = vshll.u32 %v589, 16
    %v593 = vshrl.u32 %v589, 16
    %v594 = vshll.u32 %v590, 16
    %v595 = vshrl.u32 %v590, 16
    %vm596 = vc.u32 %v588, %v592
    %v597 = vsel %vm596, 1, 0
    %v598 = vadd.s32 %v588, %v592
    %v599 = vadd.s32 %v591, %v597
    %vm600 = vc.u32 %v598, %v594
    %v601 = vsel %vm600, 1, 0
    %v602 = vadd.s32 %v598, %v594
    %v603 = vadd.s32 %v599, %v601
    %v604 = vadd.s32 %v603, %v593
    %v605 = vadd.s32 %v604, %v595
    %v606 = vand.u32 %v583, 65535
    %v607 = vshrl.u32 %v583, 16
    %v608 = vand.u32 %v578, 65535
    %v609 = vshrl.u32 %v578, 16
    %v610 = vmul.u32 %v606, %v608
    %v611 = vmul.u32 %v606, %v609
    %v612 = vmul.u32 %v607, %v608
    %v613 = vmul.u32 %v607, %v609
    %v614 = vshll.u32 %v611, 16
    %v615 = vshrl.u32 %v611, 16
    %v616 = vshll.u32 %v612, 16
    %v617 = vshrl.u32 %v612, 16
    %vm618 = vc.u32 %v610, %v614
    %v619 = vsel %vm618, 1, 0
    %v620 = vadd.s32 %v610, %v614
    %v621 = vadd.s32 %v613, %v619
    %vm622 = vc.u32 %v620, %v616
    %v623 = vsel %vm622, 1, 0
    %v624 = vadd.s32 %v620, %v616
    %v625 = vadd.s32 %v621, %v623
    %v626 = vadd.s32 %v625, %v615
    %v627 = vadd.s32 %v626, %v617
    %v628 = vmul.u32 %v583, %v574
    %v629 = vadd.s32 %v605, %v624
    %vm630 = vc.u32 %v605, %v624
    %v631 = vadd.s32 %v627, 1
    %v632 = vsel %vm630, %v631, %v627
    %v633 = vadd.s32 %v628, %v632
    %v634 = vadd.s32 %v633, 536870912
    %v635 = vshrl.u32 %v634, 30
    %v636 = vshll.u32 %v635, 30
    %v637 = vsub.s32 %v633, %v636
    %vm638 = vcmp.lt.s32.totalorder %v637, 0
    %v639 = vsub.s32 0, %v637
    %v640 = vsel %vm638, %v639, %v637
    %v641 = vclz %v640
    %v642 = vsub.s32 %v641, 2
    %vm643 = vcmp.gt.s32.totalorder 0, %v642
    %v644 = vsel %vm643, 0, %v642
    %v645 = vsub.s32 32, %v644
    %v646 = vshll.u32 %v637, %v644
    %v647 = vshrl.u32 %v629, %v645
    %v648 = vor.u32 %v646, %v647
    %v649 = vsub.s32 4294967266, %v644
    %v650 = vadd.s32 %v649, 127
    %v651 = vshll.u32 %v650, 23
    %v652 = vor.u32 4788187, %v651
    %v653 = vand.u32 2147483647, %v652
    %v655 = vcvt.s32.f32 %v648
    %v656 = vmul.f32 %v655, %v653
    %v657 = vxor.u32 %v656, 2147483648
    %v658 = vsel %vm537, %v657, %v656
    %v659 = vsub.s32 4, %v635
    %v660 = vsel %vm537, %v659, %v635
    %v661 = vsel %vm536, %v532, %v658
    %v662 = vsel %vm536, 0, %v660
    %v663 = vmul.f32 %v661, %v661
    %v664 = vmul.f32 %v663, -0.001358992
    %v665 = vadd.f32 %v664, 0.041655596
    %v666 = vmul.f32 %v663, %v665
    %v667 = vadd.f32 %v666, -0.4999988
    %v668 = vmul.f32 %v663, %v667
    %v669 = vadd.f32 1.0, %v668
    %v670 = vmul.f32 %v661, %v661
    %v671 = vmul.f32 %v670, -0.00019511016
    %v672 = vadd.f32 %v671, 0.008332121
    %v673 = vmul.f32 %v670, %v672
    %v674 = vadd.f32 %v673, -0.16666654
    %v675 = vmul.f32 %v670, %v674
    %v676 = vadd.f32 %v675, 1.0
    %v677 = vmul.f32 %v676, %v661
    %vm678 = vweird.f32 %v532
    %v679 = vand.u32 %v662, 3
    %vm680 = vcmp.lt.s32.totalorder %v679, 2
    %vm681 = vcmp.eq.s32.totalorder %v679, 0
    %v682 = vxor.u32 %v677, 2147483648
    %v683 = vsel %vm681, %v669, %v682
    %vm684 = vcmp.eq.s32.totalorder %v679, 2
    %v685 = vxor.u32 %v669, 2147483648
    %v686 = vsel %vm684, %v685, %v677
    %v687 = vsel %vm680, %v683, %v686
    %v688 = vsel %vm678, nan, %v687
    %v689 = vand.u32 2147483647, %v532
    %vm690 = vcmp.le.f32.partialorder %v689, 0.7853982
    %vm691 = vcmp.lt.s32.totalorder %v532, 0
    %v692 = vand.u32 %v532, 2139095040
    %v693 = vshrl.u32 %v692, 23
    %v694 = vsub.s32 %v693, 127
    %v695 = vand.u32 2147483647, %v532
    %v696 = vand.u32 %v695, 8388607
    %v697 = vor.u32 %v696, 8388608
    %v698 = vsub.s32 0, %v697
    %v699 = vadd.s32 %v694, 1
    %vm700 = vcmp.gt.s32.totalorder %v699, 0
    %v701 = vsel %vm700, %v699, 0
    %v702 = vshrl.u32 %v701, 5
    %v703 = vand.u32 %v701, 31
    %v704 = vsub.s32 32, %v703
    %v705 = vshrl.u32 683565275, %v704
    %v706 = vshll.u32 683565275, %v703
    %v707 = vshrl.u32 2475754826, %v704
    %v708 = vor.u32 %v706, %v707
    %v709 = vshll.u32 2475754826, %v703
    %v710 = vshrl.u32 2131351028, %v704
    %v711 = vor.u32 %v709, %v710
    %v712 = vshll.u32 2131351028, %v703
    %v713 = vshrl.u32 2102212464, %v704
    %v714 = vor.u32 %v712, %v713
    %v715 = vshll.u32 2102212464, %v703
    %v716 = vshrl.u32 920167782, %v704
    %v717 = vor.u32 %v715, %v716
    %v718 = vshll.u32 920167782, %v703
    %v719 = vshrl.u32 1326507024, %v704
    %v720 = vor.u32 %v718, %v719
    %vm721 = vcmp.lt.s32.totalorder %v702, 1
    %vm722 = vcmp.lt.s32.totalorder %v702, 2
    %vm723 = vcmp.lt.s32.totalorder %v702, 3
    %vm724 = vcmp.lt.s32.totalorder %v702, 4
    %v725 = vsel %vm721, %v705, %v708
    %v726 = vsel %vm724, %v714, 2102212464
    %v727 = vsel %vm723, %v711, %v726
    %v728 = vsel %vm722, %v725, %v727
    %v729 = vsel %vm721, %v708, %v711
    %v730 = vsel %vm724, %v717, 920167782
    %v731 = vsel %vm723, %v714, %v730
    %v732 = vsel %vm722, %v729, %v731
    %v733 = vsel %vm721, %v711, %v714
    %v734 = vsel %vm724, %v720, 1326507024
    %v735 = vsel %vm723, %v717, %v734
    %v736 = vsel %vm722, %v733, %v735
    %v737 = vshll.u32 %v697, 8
    %v738 = vand.u32 %v737, 65535
    %v739 = vshrl.u32 %v737, 16
    %v740 = vand.u32 %v736, 65535
    %v741 = vshrl.u32 %v736, 16
    %v742 = vmul.u32 %v738, %v740
    %v743 = vmul.u32 %v738, %v741
    %v744 = vmul.u32 %v739, %v740
    %v745 = vmul.u32 %v739, %v741
    %v746 = vshll.u32 %v743, 16
    %v747 = vshrl.u32 %v743, 16
    %v748 = vshll.u32 %v744, 16
    %v749 = vshrl.u32 %v744, 16
    %vm750 = vc.u32 %v742, %v746
    %v751 = vsel %vm750, 1, 0
    %v752 = vadd.s32 %v742, %v746
    %v753 = vadd.s32 %v745, %v751
    %vm754 = vc.u32 %v752, %v748
    %v755 = vsel %vm754, 1, 0
    %v756 = vadd.s32 %v752, %v748
    %v757 = vadd.s32 %v753, %v755
    %v758 = vadd.s32 %v757, %v747
    %v759 = vadd.s32 %v758, %v749
    %v760 = vand.u32 %v737, 65535
    %v761 = vshrl.u32 %v737, 16
    %v762 = vand.u32 %v732, 65535
    %v763 = vshrl.u32 %v732, 16
    %v764 = vmul.u32 %v760, %v762
    %v765 = vmul.u32 %v760, %v763
    %v766 = vmul.u32 %v761, %v762
    %v767 = vmul.u32 %v761, %v763
    %v768 = vshll.u32 %v765, 16
    %v769 = vshrl.u32 %v765, 16
    %v770 = vshll.u32 %v766, 16
    %v771 = vshrl.u32 %v766, 16
    %vm772 = vc.u32 %v764, %v768
    %v773 = vsel %vm772, 1, 0
    %v774 = vadd.s32 %v764, %v768
    %v775 = vadd.s32 %v767, %v773
    %vm776 = vc.u32 %v774, %v770
    %v777 = vsel %vm776, 1, 0
    %v778 = vadd.s32 %v774, %v770
    %v779 = vadd.s32 %v775, %v777
    %v780 = vadd.s32 %v779, %v769
    %v781 = vadd.s32 %v780, %v771
    %v782 = vmul.u32 %v737, %v728
    %v783 = vadd.s32 %v759, %v778
    %vm784 = vc.u32 %v759, %v778
    %v785 = vadd.s32 %v781, 1
    %v786 = vsel %vm784, %v785, %v781
    %v787 = vadd.s32 %v782, %v786
    %v788 = vadd.s32 %v787, 536870912
    %v789 = vshrl.u32 %v788, 30
    %v790 = vshll.u32 %v789, 30
    %v791 = vsub.s32 %v787, %v790
    %vm792 = vcmp.lt.s32.totalorder %v791, 0
    %v793 = vsub.s32 0, %v791
    %v794 = vsel %vm792, %v793, %v791
    %v795 = vclz %v794
    %v796 = vsub.s32 %v795, 2
    %vm797 = vcmp.gt.s32.totalorder 0, %v796
    %v798 = vsel %vm797, 0, %v796
    %v799 = vsub.s32 32, %v798
    %v800 = vshll.u32 %v791, %v798
    %v801 = vshrl.u32 %v783, %v799
    %v802 = vor.u32 %v800, %v801
    %v803 = vsub.s32 4294967266, %v798
    %v804 = vadd.s32 %v803, 127
    %v805 = vshll.u32 %v804, 23
    %v806 = vor.u32 4788187, %v805
    %v807 = vand.u32 2147483647, %v806
    %v809 = vcvt.s32.f32 %v802
    %v810 = vmul.f32 %v809, %v807
    %v811 = vxor.u32 %v810, 2147483648
    %v812 = vsel %vm691, %v811, %v810
    %v813 = vsub.s32 4, %v789
    %v814 = vsel %vm691, %v813, %v789
    %v815 = vsel %vm690, %v532, %v812
    %v816 = vsel %vm690, 0, %v814
    %v817 = vmul.f32 %v815, %v815
    %v818 = vmul.f32 %v817, -0.001358992
    %v819 = vadd.f32 %v818, 0.041655596
    %v820 = vmul.f32 %v817, %v819
    %v821 = vadd.f32 %v820, -0.4999988
    %v822 = vmul.f32 %v817, %v821
    %v823 = vadd.f32 1.0, %v822
    %v824 = vmul.f32 %v815, %v815
    %v825 = vmul.f32 %v824, -0.00019511016
    %v826 = vadd.f32 %v825, 0.008332121
    %v827 = vmul.f32 %v824, %v826
    %v828 = vadd.f32 %v827, -0.16666654
    %v829 = vmul.f32 %v824, %v828
    %v830 = vadd.f32 %v829, 1.0
    %v831 = vmul.f32 %v830, %v815
    %vm832 = vweird.f32 %v532
    %v833 = vadd.s32 %v816, 3
    %v834 = vand.u32 %v833, 3
    %vm835 = vcmp.lt.s32.totalorder %v834, 2
    %vm836 = vcmp.eq.s32.totalorder %v834, 0
    %v837 = vxor.u32 %v831, 2147483648
    %v838 = vsel %vm836, %v823, %v837
    %vm839 = vcmp.eq.s32.totalorder %v834, 2
    %v840 = vxor.u32 %v823, 2147483648
    %v841 = vsel %vm839, %v840, %v831
    %v842 = vsel %vm835, %v838, %v841
    %v843 = vsel %vm832, nan, %v842
    %v844 = vmul.f32 %v532, 0.5
    %v845 = vmul.f32 %v532, %v407
    %v846 = vmul.f32 %v845, %v845
    %v847 = vmin.f32 16.0, %v846
    %v848 = vmul.f32 %v847, 2.1237322e-06
    %v849 = vadd.f32 %v848, 0.00028619796
    %v850 = vmul.f32 %v847, %v849
    %v851 = vadd.f32 %v850, 0.0036580483
    %v852 = vmul.f32 %v847, %v851
    %v853 = vadd.f32 %v852, 0.05243302
    %v854 = vmul.f32 %v847, %v853
    %v855 = vadd.f32 %v854, 0.18741608
    %v856 = vmul.f32 %v847, %v855
    %v857 = vadd.f32 %v856, 1.1283791
    %v858 = vmul.f32 %v845, %v857
    %v859 = vmul.f32 %v847, 3.8918573e-05
    %v860 = vadd.f32 %v859, 0.001143296
    %v861 = vmul.f32 %v847, %v860
    %v862 = vadd.f32 %v861, 0.014752088
    %v863 = vmul.f32 %v847, %v862
    %v864 = vadd.f32 %v863, 0.112945676
    %v865 = vmul.f32 %v847, %v864
    %v866 = vadd.f32 %v865, 0.4994258
    %v867 = vmul.f32 %v847, %v866
    %v868 = vadd.f32 %v867, 1.0
    %v869 = vrcp.pop %v868
    %v870 = vmul.f32 %v868, %v869
    %v871 = vsub.f32 1.0, %v870
    %v872 = vmul.f32 %v869, %v871
    %v873 = vadd.f32 %v869, %v872
    %vm874 = vweird.f32 %v868
    %vm875 = vweird.f32 %v869
    %vm876 = vmor %vm874, %vm875
    %v877 = vsel %vm876, %v869, %v873
    %v878 = vand.u32 2147483647, %v868
    %vm879 = vcmp.eq.f32.partialorder %v878, 8.507059e+37
    %v880 = vand.u32 %v868, 2147483648
    %v881 = vor.u32 1.1754944e-38, %v880
    %v882 = vsel %vm879, %v881, %v877
    %v883 = vmul.f32 %v858, %v882
    %v884 = vmin.f32 %v883, 1.0
    %v885 = vmax.f32 %v884, -1.0
    %v886 = vadd.f32 %v885, 1.0
    %v887 = vmul.f32 %v844, %v886
    %v888 = vsel %vm62, %v843, %v887
    %v889 = vsel %vm61, %v688, %v888
    %v890 = vld [vmem:[#allocation4] sm:$0xf]
    %v891 = vld [vmem:[#allocation4 + $0x4] sm:$0xf]
    %v892 = vld [vmem:[#allocation4 + $0x8] sm:$0xf]
    %v893 = vld [vmem:[#allocation4 + $0xc] sm:$0xf]
    %v894 = vld [vmem:[#allocation4 + $0x10] sm:$0xf]
    %v895 = vld [vmem:[#allocation4 + $0x14] sm:$0xf]
    %v896 = vld [vmem:[#allocation4 + $0x18] sm:$0xf]
    %v897 = vld [vmem:[#allocation4 + $0x1c] sm:$0xf]
    %v898 = vld [vmem:[#allocation4 + $0x20] sm:$0xf]
    %v899 = vld [vmem:[#allocation4 + $0x24] sm:$0xf]
    %v900 = vld [vmem:[#allocation4 + $0x28] sm:$0xf]
    %v901 = vld [vmem:[#allocation4 + $0x2c] sm:$0xf]
    %v902 = vld [vmem:[#allocation4 + $0x30] sm:$0xf]
    %v903 = vld [vmem:[#allocation4 + $0x34] sm:$0xf]
    %v904 = vld [vmem:[#allocation4 + $0x38] sm:$0xf]
    %v905 = vld [vmem:[#allocation4 + $0x3c] sm:$0xf]
    %v906 = vld [vmem:[%s6] sm:$0x1]
    %v907 = vpack.c.bf16 %v889, %v889
    %v909 = vperm.slane %v906, 0
    %v927 = vunpack.c.l.b16 %v890
    %v928 = vunpack.c.l.b16 %v891
    %v929 = vunpack.c.l.b16 %v892
    %v930 = vunpack.c.l.b16 %v893
    %v931 = vunpack.c.l.b16 %v894
    %v932 = vunpack.c.l.b16 %v895
    %v933 = vunpack.c.l.b16 %v896
    %v934 = vunpack.c.l.b16 %v897
    %v935 = vunpack.c.l.b16 %v898
    %v936 = vunpack.c.l.b16 %v899
    %v937 = vunpack.c.l.b16 %v900
    %v938 = vunpack.c.l.b16 %v901
    %v939 = vunpack.c.l.b16 %v902
    %v940 = vunpack.c.l.b16 %v903
    %v941 = vunpack.c.l.b16 %v904
    %v942 = vunpack.c.l.b16 %v905
    %v943 = vpack.c.b16 %v928, %v927
    %v944 = vpack.c.b16 %v930, %v929
    %v945 = vpack.c.b16 %v932, %v931
    %v946 = vpack.c.b16 %v934, %v933
    %v947 = vpack.c.b16 %v936, %v935
    %v948 = vpack.c.b16 %v938, %v937
    %v949 = vpack.c.b16 %v940, %v939
    %v950 = vpack.c.b16 %v942, %v941
    %959 = vmatpush.bf16.msra.mxu0 %v950
    %960 = vmatpush.bf16.msra.mxu0 %v949
    %961 = vmatpush.bf16.msra.mxu0 %v948
    %962 = vmatpush.bf16.msra.mxu0 %v947
    %963 = vmatpush.bf16.msra.mxu0 %v946
    %964 = vmatpush.bf16.msra.mxu0 %v945
    %965 = vmatpush.bf16.msra.mxu0 %v944
    %966 = vmatpush.bf16.msra.mxu0 %v943
    %967 = vmatmul.bf16.gmra.mxu0 %v907
    %v968 = vpop.f32.mrf.mxu0
    %v969 = vadd.f32 %v909, %v968
    %v970 = vpop.f32.mrf.mxu0
    %971 = vdwg.mxu0
    %972 = vst [vmem:[%s7] sm:$0xff] %v969
    // Predicated region
    $region38: #{forward.1} parent=1 // pred_check
      _
    $region39: #{forward.1} parent=1 // pred_check_branch
      %974 = sbr.rel (0) target = $region41
    $region40: #{forward.1} parent=1 // pred_region
      _
    $region41: #{forward.1} parent=1 // pred_fallthru
      _
    // Predicated region
    $region42: #{forward.1} parent=1 // pred_check
      _
    $region43: #{forward.1} parent=1 // pred_check_branch
      %976 = sbr.rel (0) target = $region45
    $region44: #{forward.1} parent=1 // pred_region
      _
    $region45: #{forward.1} parent=1 // pred_fallthru
      _
    %977 = vsyncpa [#allocation3], 1
    %978 = vsyncpa [#allocation5], 1

</llo_original>
